<compile_context>
chip_gen: v7x
topology: tpu7x:2x2x1
jax: 0.10.0
libtpu: 0.0.40
codegen_flags: <defaults>
</compile_context>

<pallas_src>
import jax
import jax.numpy as jnp
from jax.experimental import pallas as pl
from jax.experimental.pallas import tpu as pltpu

LANES = 512  # lane-dense last dim (multiple of 128)


def _linear_kernel(w_ref, b_ref, x_ref, o_ref):
    # w_ref, b_ref: (1,) scalars in SMEM
    # x_ref, o_ref: (block_rows, LANES) f32 VMEM tiles
    o_ref[...] = x_ref[...] * w_ref[0] + b_ref[0]


def linear_1x1(x, weight, bias, *, block_rows=512):
    """x: (N, 1) f32, weight: (1, 1) f32, bias: (1,) f32 -> (N, 1) f32."""
    n = x.shape[0]
    dtype = x.dtype

    # ---- repack (N, 1) -> lane-dense (rows, LANES) slab ------------------
    flat = x.reshape(-1)                       # (N,)
    rows = pl.cdiv(n, LANES)
    rows = max(((rows + 7) // 8) * 8, 8)       # sublane multiple of 8
    br = min(block_rows, rows)                 # block rows (multiple of 8)
    rows = ((rows + br - 1) // br) * br        # make rows a multiple of br
    padded = rows * LANES
    if padded != n:
        flat = jnp.pad(flat, (0, padded - n))
    slab = flat.reshape(rows, LANES)

    grid = (rows // br,)

    out_slab = pl.pallas_call(
        _linear_kernel,
        out_shape=jax.ShapeDtypeStruct((rows, LANES), dtype),
        grid_spec=pltpu.PrefetchScalarGridSpec(
            num_scalar_prefetch=0,
            grid=grid,
            in_specs=[
                pl.BlockSpec(memory_space=pltpu.MemorySpace.SMEM),   # weight
                pl.BlockSpec(memory_space=pltpu.MemorySpace.SMEM),   # bias
                pl.BlockSpec((br, LANES), lambda i: (i, 0)),         # x slab
            ],
            out_specs=pl.BlockSpec((br, LANES), lambda i: (i, 0)),
        ),
        compiler_params=pltpu.CompilerParams(
            dimension_semantics=("parallel",),
        ),
    )(weight.reshape(-1), bias.reshape(-1), slab)

    # ---- unpack back to (N, 1) -------------------------------------------
    return out_slab.reshape(-1)[:n].reshape(n, 1)


if __name__ == "__main__":
    key = jax.random.PRNGKey(0)
    k_x, k_w, k_b = jax.random.split(key, 3)

    # Deterministic parameter init mimicking torch Linear(1,1) (U(-1,1), fan_in=1).
    weight = jax.random.uniform(k_w, (1, 1), jnp.float32, minval=-1.0, maxval=1.0)
    bias = jax.random.uniform(k_b, (1,), jnp.float32, minval=-1.0, maxval=1.0)

    # Small input consistent with the module's usage (x = range(100), one feature).
    N = 100
    x = jnp.arange(N, dtype=jnp.float32).reshape(N, 1)
    x = x + 0.0 * jax.random.normal(k_x, (N, 1), jnp.float32)  # keep key usage

    y = linear_1x1(x, weight, bias)
    y = jax.block_until_ready(y)

    # Reference check in plain JAX (same math as torch.nn.Linear)
    y_ref = x @ weight.T + bias
    assert y.shape == (N, 1)
    assert jnp.allclose(y, y_ref, atol=1e-6), "mismatch vs reference"

    print("KERNEL_OK")
</pallas_src>

<mosaic_0001>
module attributes {stable_mosaic.version = 11 : i64} {
  func.func @_linear_kernel(%arg0: i32, %arg1: memref<1xf32, #tpu.memory_space<smem>>, %arg2: memref<1xf32, #tpu.memory_space<smem>>, %arg3: memref<8x512xf32, #tpu.memory_space<vmem>>, %arg4: memref<8x512xf32, #tpu.memory_space<vmem>>) attributes {dimension_semantics = [#tpu.dimension_semantics<parallel>], iteration_bounds = array<i64: 1>, scalar_prefetch = 0 : i64, scratch_operands = 0 : i64, tpu.core_type = #tpu.core_type<tc>, window_params = [{transform_indices = @transform_0, window_bounds = array<i64: 1>}, {transform_indices = @transform_1, window_bounds = array<i64: 1>}, {transform_indices = @transform_2, window_bounds = array<i64: 8, 512>}, {transform_indices = @transform_3, window_bounds = array<i64: 8, 512>}]} {
    %c0 = arith.constant 0 : index
    %c0_0 = arith.constant 0 : index
    %0 = vector.load %arg3[%c0, %c0_0] : memref<8x512xf32, #tpu.memory_space<vmem>>, vector<8x512xf32>
    %c0_1 = arith.constant 0 : index
    %1 = memref.load %arg1[%c0_1] : memref<1xf32, #tpu.memory_space<smem>>
    %2 = vector.broadcast %1 : f32 to vector<8x512xf32>
    %3 = arith.mulf %0, %2 : vector<8x512xf32>
    %c0_2 = arith.constant 0 : index
    %4 = memref.load %arg2[%c0_2] : memref<1xf32, #tpu.memory_space<smem>>
    %5 = vector.broadcast %4 : f32 to vector<8x512xf32>
    %6 = arith.addf %3, %5 : vector<8x512xf32>
    %c0_3 = arith.constant 0 : index
    %c0_4 = arith.constant 0 : index
    %7 = vector.load %arg4[%c0_3, %c0_4] : memref<8x512xf32, #tpu.memory_space<vmem>>, vector<8x512xf32>
    tpu.vector_store %arg4[%c0_3, %c0_4], %6 {strides = array<i32>} : memref<8x512xf32, #tpu.memory_space<vmem>>, vector<8x512xf32>,
    return
  }
  func.func @transform_0(%arg0: i32) -> i32 {
    %c0_i32 = arith.constant 0 : i32
    %c0_i32_0 = arith.constant 0 : i32
    return %c0_i32 : i32
  }
  func.func @transform_1(%arg0: i32) -> i32 {
    %c0_i32 = arith.constant 0 : i32
    %c0_i32_0 = arith.constant 0 : i32
    return %c0_i32 : i32
  }
  func.func @transform_2(%arg0: i32) -> (i32, i32) {
    %c0_i32 = arith.constant 0 : i32
    %c0_i32_0 = arith.constant 0 : i32
    return %arg0, %c0_i32 : i32, i32
  }
  func.func @transform_3(%arg0: i32) -> (i32, i32) {
    %c0_i32 = arith.constant 0 : i32
    %c0_i32_0 = arith.constant 0 : i32
    return %arg0, %c0_i32 : i32, i32
  }
}

</mosaic_0001>

<llo_original>
// kernel: tpu_custom_call.1
$region0: #{tpu_custom_call.1}
  #allocation0 [shape = 'u32[]', space=smem, size = 0x4, offset = 0x4, fixed_abs, tag = 'smem constant byte address 0x4 - core index']
  #allocation1 [shape = 'u32[144,128]{1,0:T(1,128)}', space=vmem, size = 0x12000, scoped, tag = 'internal scratch']
  #allocation2 [shape = 'f32[1]{0:T(128)S(6)}', space=smem, size = 0x200, scoped, tag = 'scoped memory for tpu_custom_call.1']
  #allocation3 [shape = 'f32[1]{0:T(128)S(6)}', space=smem, size = 0x200, scoped, tag = 'scoped memory for tpu_custom_call.1']
  %s0 = inlined_call_operand.<no memory space> [shape: f32[1], index: 0, kind: input, shape index: {}]
  %s1 = inlined_call_operand.<no memory space> [shape: f32[1], index: 1, kind: input, shape index: {}]
  %s2 = inlined_call_operand.hbm [shape: f32[8,512], index: 2, kind: input, shape index: {}]
  %s3 = inlined_call_operand.hbm [shape: f32[8,512], index: 3, kind: output, shape index: {}]
  %s4 = sld [smem:[#allocation0]]
  $region26: #{tpu_custom_call.1} parent=0
    _
  %s6 = ssub.s32 1, %s4
  %s7 = scalar_select 0, %s6, %s4
  %8 = sst [smem:[#allocation2]] %s0
  %9 = sst [smem:[#allocation3]] %s1
  $region1: #{tpu_custom_call.1} parent=0
    #allocation4 [shape = 'u8[16384]{0}', space=vmem, size = 0x4000, scoped, tag = 'input window, operand 2, single buffered']
    #allocation5 [shape = 's32[1]{0}', space=sflag, size = 0x4, scoped, tag = 'scoped memory for tpu_custom_call.1']
    #allocation6 [shape = 's32[1]{0}', space=sflag, size = 0x4, scoped, tag = 'scoped memory for tpu_custom_call.1']
    #allocation7 [shape = 'u8[16384]{0}', space=vmem, size = 0x4000, scoped, tag = 'output window, operand 0, single buffered']
    %10 = vsyncpa [#allocation5], 0
    %11 = vsyncpa [#allocation6], 0
    // Predicated region
    $region2: #{tpu_custom_call.1} parent=1 // pred_check
      _
    $region3: #{tpu_custom_call.1} parent=1 // pred_check_branch
      %13 = sbr.rel (0) target = $region5
    $region4: #{tpu_custom_call.1} parent=1 // pred_region
      _
    $region5: #{tpu_custom_call.1} parent=1 // pred_fallthru
      _
    // Predicated region
    $region6: #{tpu_custom_call.1} parent=1 // pred_check
      _
    $region7: #{tpu_custom_call.1} parent=1 // pred_check_branch
      %15 = sbr.rel (0) target = $region9
    $region8: #{tpu_custom_call.1} parent=1 // pred_region
      _
    $region9: #{tpu_custom_call.1} parent=1 // pred_fallthru
      _
    // Predicated region
    $region10: #{tpu_custom_call.1} parent=1 // pred_check
      _
    $region11: #{tpu_custom_call.1} parent=1 // pred_check_branch
      %17 = sbr.rel (0) target = $region13
    $region12: #{tpu_custom_call.1} parent=1 // pred_region
      %s19 = ssub.s32 512, 512
      %20 = vsyncadd [#allocation5], %s19
      %s22 = sshll.u32 [#allocation4], 4
      %s23 = int_to_ptr.vmem [resolvable:$true] %s22
      %25 = dma.hbm_to_vmem [thread:$0]  %s2, 512, %s23, [#allocation5]
    $region13: #{tpu_custom_call.1} parent=1 // pred_fallthru
      _
    // Predicated region
    $region14: #{tpu_custom_call.1} parent=1 // pred_check
      _
    $region15: #{tpu_custom_call.1} parent=1 // pred_check_branch
      %27 = sbr.rel (0) target = $region17
    $region16: #{tpu_custom_call.1} parent=1 // pred_region
      %28 = dma.done [#allocation5], 512
    $region17: #{tpu_custom_call.1} parent=1 // pred_fallthru
      _
    %v29 = vld [vmem:[#allocation4] sm:$0xff]
    %v30 = vld [vmem:[#allocation4 + $0x8] sm:$0xff]
    %v31 = vld [vmem:[#allocation4 + $0x10] sm:$0xff]
    %v32 = vld [vmem:[#allocation4 + $0x18] sm:$0xff]
    %s33 = sld [smem:[#allocation2]]
    %v34 = vstv %s33
    %v35 = vmul.f32 %v29, %v34
    %v36 = vmul.f32 %v30, %v34
    %v37 = vmul.f32 %v31, %v34
    %v38 = vmul.f32 %v32, %v34
    %s39 = sld [smem:[#allocation3]]
    %v40 = vstv %s39
    %v41 = vadd.f32 %v35, %v40
    %v42 = vadd.f32 %v36, %v40
    %v43 = vadd.f32 %v37, %v40
    %v44 = vadd.f32 %v38, %v40
    %45 = vst [vmem:[#allocation7] sm:$0xff] %v41
    %46 = vst [vmem:[#allocation7 + $0x8] sm:$0xff] %v42
    %47 = vst [vmem:[#allocation7 + $0x10] sm:$0xff] %v43
    %48 = vst [vmem:[#allocation7 + $0x18] sm:$0xff] %v44
    // Predicated region
    $region18: #{tpu_custom_call.1} parent=1 // pred_check
      _
    $region19: #{tpu_custom_call.1} parent=1 // pred_check_branch
      %50 = sbr.rel (0) target = $region21
    $region20: #{tpu_custom_call.1} parent=1 // pred_region
      %s52 = ssub.s32 512, 512
      %53 = vsyncadd [#allocation6], %s52
      %s55 = sshll.u32 [#allocation7], 4
      %s56 = int_to_ptr.vmem [resolvable:$true] %s55
      %58 = dma.vmem_to_hbm [thread:$0]  %s56, 512, %s3, [#allocation6]
    $region21: #{tpu_custom_call.1} parent=1 // pred_fallthru
      _
    // Predicated region
    $region22: #{tpu_custom_call.1} parent=1 // pred_check
      _
    $region23: #{tpu_custom_call.1} parent=1 // pred_check_branch
      %60 = sbr.rel (0) target = $region25
    $region24: #{tpu_custom_call.1} parent=1 // pred_region
      %61 = dma.done [#allocation6], 512
    $region25: #{tpu_custom_call.1} parent=1 // pred_fallthru
      _
    %62 = vsyncpa [#allocation5], 1
    %63 = vsyncpa [#allocation6], 1

</llo_original>
